<compile_context>
chip_gen: v7x
topology: tpu7x:2x2x1
jax: 0.10.0
libtpu: 0.0.40
codegen_flags: <defaults>
</compile_context>

<pallas_src>
import jax
import jax.numpy as jnp
from jax.experimental import pallas as pl
from jax.experimental.pallas import tpu as pltpu

NUM_LAYERS = 10
FEAT = 10

# Below this batch size the composed affine is cheaper as a plain XLA op.
_SMALL_BATCH_CUTOFF = 4096


def mymodule_kernel(x_ref, w_ref, b_ref, o_ref):
    # x_ref: (TB, FEAT)  batch tile of activations (ragged last tile masked by Pallas)
    # w_ref: (FEAT, FEAT) pre-composed effective weight, (in, out), in x.dtype
    # b_ref: (1, FEAT)    pre-composed effective bias, f32
    # o_ref: (TB, FEAT)   output tile
    y = jnp.dot(x_ref[...], w_ref[...], preferred_element_type=jnp.float32)
    o_ref[...] = (y + b_ref[...]).astype(o_ref.dtype)


def _compose_affine_chain(weights, biases):
    """Fold the 10-layer chain into one affine map.

    Per layer (torch layout W: (out, in)):
        x -> x @ (W[i//2] + W[i]).T + (b[i//2] + b[i])
    Composed left-to-right:  x -> x @ W_eff + b_eff.
    """
    w_eff = jnp.eye(FEAT, dtype=jnp.float32)            # (in, out)
    b_eff = jnp.zeros((FEAT,), dtype=jnp.float32)
    for i in range(NUM_LAYERS):
        j = i // 2
        a_i = (weights[j] + weights[i]).T.astype(jnp.float32)   # (in, out)
        c_i = (biases[j] + biases[i]).astype(jnp.float32)       # (out,)
        w_eff = w_eff @ a_i
        b_eff = b_eff @ a_i + c_i
    return w_eff, b_eff.reshape(1, FEAT)


def _round_up(n, m):
    return ((n + m - 1) // m) * m


def mymodule_forward(x, weights, biases, *, tb_max=8192, use_pallas=None):
    """x: (B, 10); weights: (10, 10, 10) torch-layout (out, in); biases: (10, 10)."""
    B, F = x.shape
    assert F == FEAT

    # Pre-compose the entire layer chain outside the kernel (negligible cost).
    w_eff, b_eff = _compose_affine_chain(weights, biases)

    if use_pallas is None:
        use_pallas = B >= _SMALL_BATCH_CUTOFF
    if not use_pallas:
        # Small-batch fast path: one tiny XLA matmul, no kernel-launch overhead.
        y = jnp.dot(x, w_eff.astype(x.dtype), preferred_element_type=jnp.float32)
        return (y + b_eff).astype(x.dtype)

    # Batch tile: multiple of 8 (sublane), aim for >= 2 grid steps so the
    # "parallel" batch axis can use both TensorCores on v7x, capped at tb_max
    # so the lane-padded (TB,128) f32 buffers fit scoped VMEM on all gens.
    tb = min(tb_max, max(8, _round_up(pl.cdiv(B, 2), 8)))
    grid = (pl.cdiv(B, tb),)   # ragged last block handled by Pallas masking

    w_k = w_eff.astype(x.dtype)   # feed the MXU in the activation dtype

    out = pl.pallas_call(
        mymodule_kernel,
        out_shape=jax.ShapeDtypeStruct((B, F), x.dtype),
        grid=grid,
        in_specs=[
            pl.BlockSpec((tb, F), lambda i: (i, 0)),   # activations, tiled over batch
            pl.BlockSpec((F, F), lambda i: (0, 0)),    # composed weight, replicated
            pl.BlockSpec((1, F), lambda i: (0, 0)),    # composed bias, replicated
        ],
        out_specs=pl.BlockSpec((tb, F), lambda i: (i, 0)),
        compiler_params=pltpu.CompilerParams(
            dimension_semantics=("parallel",),
            vmem_limit_bytes=32 << 20),
    )(x, w_k, b_eff)
    return out


def mymodule_reference(x, weights, biases):
    # Pure-JAX reference mirroring the PyTorch forward exactly (no fusion).
    for i in range(NUM_LAYERS):
        j = i // 2
        x = (x @ weights[j].T + biases[j]) + (x @ weights[i].T + biases[i])
    return x


if __name__ == "__main__":
    key = jax.random.PRNGKey(0)
    kx, kw, kb = jax.random.split(key, 3)

    # Small batch, deliberately NOT a multiple of the tile size, so the
    # pad-free ragged-last-block path is exercised.
    B = 200
    bound = 1.0 / jnp.sqrt(jnp.float32(FEAT))
    weights = jax.random.uniform(
        kw, (NUM_LAYERS, FEAT, FEAT), jnp.float32, minval=-bound, maxval=bound)
    biases = jax.random.uniform(
        kb, (NUM_LAYERS, FEAT), jnp.float32, minval=-bound, maxval=bound)
    x = jax.random.normal(kx, (B, FEAT), jnp.float32)

    # Force the Pallas path so the kernel itself runs (auto-dispatch would use
    # the plain-JAX fast path at this small batch size).
    out = mymodule_forward(x, weights, biases, use_pallas=True)
    out = jax.block_until_ready(out)

    ref = mymodule_reference(x, weights, biases)
    assert out.shape == (B, FEAT)
    # Fusion/composition is mathematically exact; only rounding order differs.
    assert jnp.allclose(out, ref, rtol=1e-3, atol=1e-3), "mismatch vs reference"

    print("KERNEL_OK")
</pallas_src>

<mosaic_0001>
module attributes {stable_mosaic.version = 11 : i64} {
  func.func @mymodule_kernel(%arg0: i32, %arg1: memref<104x10xf32, #tpu.memory_space<vmem>>, %arg2: memref<10x10xf32, #tpu.memory_space<vmem>>, %arg3: memref<1x10xf32, #tpu.memory_space<vmem>>, %arg4: memref<104x10xf32, #tpu.memory_space<vmem>>) attributes {dimension_semantics = [#tpu.dimension_semantics<parallel>], iteration_bounds = array<i64: 2>, scalar_prefetch = 0 : i64, scratch_operands = 0 : i64, tpu.core_type = #tpu.core_type<tc>, window_params = [{transform_indices = @transform_0, window_bounds = array<i64: 104, 10>}, {pipeline_mode = #tpu.pipeline_mode<synchronous>, transform_indices = @transform_1, window_bounds = array<i64: 10, 10>}, {pipeline_mode = #tpu.pipeline_mode<synchronous>, transform_indices = @transform_2, window_bounds = array<i64: 1, 10>}, {transform_indices = @transform_3, window_bounds = array<i64: 104, 10>}]} {
    %c0 = arith.constant 0 : index
    %c0_0 = arith.constant 0 : index
    %0 = vector.load %arg1[%c0, %c0_0] : memref<104x10xf32, #tpu.memory_space<vmem>>, vector<104x10xf32>
    %c0_1 = arith.constant 0 : index
    %c0_2 = arith.constant 0 : index
    %1 = vector.load %arg2[%c0_1, %c0_2] : memref<10x10xf32, #tpu.memory_space<vmem>>, vector<10x10xf32>
    %cst = arith.constant dense<0.000000e+00> : vector<104x10xf32>
    %2 = tpu.matmul %0, %1, %cst {dimension_numbers = #tpu.dot_dimension_numbers<[1], [0], [0], [1], [0, 0, 1, 1], [], []>} : vector<104x10xf32>, vector<10x10xf32>, vector<104x10xf32> -> vector<104x10xf32>
    %c0_3 = arith.constant 0 : index
    %c0_4 = arith.constant 0 : index
    %3 = vector.load %arg3[%c0_3, %c0_4] : memref<1x10xf32, #tpu.memory_space<vmem>>, vector<1x10xf32>
    %4 = vector.broadcast %3 : vector<1x10xf32> to vector<104x10xf32>
    %5 = arith.addf %2, %4 : vector<104x10xf32>
    %c0_5 = arith.constant 0 : index
    %c0_6 = arith.constant 0 : index
    %6 = vector.load %arg4[%c0_5, %c0_6] : memref<104x10xf32, #tpu.memory_space<vmem>>, vector<104x10xf32>
    tpu.vector_store %arg4[%c0_5, %c0_6], %5 {strides = array<i32>} : memref<104x10xf32, #tpu.memory_space<vmem>>, vector<104x10xf32>,
    return
  }
  func.func @transform_0(%arg0: i32) -> (i32, i32) {
    %c0_i32 = arith.constant 0 : i32
    %c0_i32_0 = arith.constant 0 : i32
    return %arg0, %c0_i32 : i32, i32
  }
  func.func @transform_1(%arg0: i32) -> (i32, i32) {
    %c0_i32 = arith.constant 0 : i32
    %c0_i32_0 = arith.constant 0 : i32
    %c0_i32_1 = arith.constant 0 : i32
    return %c0_i32, %c0_i32_0 : i32, i32
  }
  func.func @transform_2(%arg0: i32) -> (i32, i32) {
    %c0_i32 = arith.constant 0 : i32
    %c0_i32_0 = arith.constant 0 : i32
    %c0_i32_1 = arith.constant 0 : i32
    return %c0_i32, %c0_i32_0 : i32, i32
  }
  func.func @transform_3(%arg0: i32) -> (i32, i32) {
    %c0_i32 = arith.constant 0 : i32
    %c0_i32_0 = arith.constant 0 : i32
    return %arg0, %c0_i32 : i32, i32
  }
}

</mosaic_0001>

<llo_original>
// kernel: tpu_custom_call.1
$region0: #{tpu_custom_call.1}
  #allocation0 [shape = 'u32[]', space=smem, size = 0x4, offset = 0x4, fixed_abs, tag = 'smem constant byte address 0x4 - core index']
  #allocation1 [shape = 'u32[144,128]{1,0:T(1,128)}', space=vmem, size = 0x12000, scoped, tag = 'internal scratch']
  %s0 = inlined_call_operand.vmem [shape: f32[200,10], index: 0, kind: input, shape index: {}]
  %s1 = inlined_call_operand.vmem [shape: f32[10,10], index: 1, kind: input, shape index: {}]
  %s2 = inlined_call_operand.vmem [shape: f32[1,10], index: 2, kind: input, shape index: {}]
  %s3 = inlined_call_operand.vmem [shape: f32[200,10], index: 3, kind: output, shape index: {}]
  %s4 = sld [smem:[#allocation0]]
  $region93: #{tpu_custom_call.1} parent=0
    _
  %s6 = ssub.s32 1, %s4
  %s7 = scalar_select 0, %s6, %s4
  $region1: #{tpu_custom_call.1} parent=0
    #allocation2 [shape = 'u8[106496]{0}', space=vmem, size = 0x1a000, scoped, tag = 'output window, operand 0']
    loop: start=0, step=1, limit=4
    $region2: #{tpu_custom_call.1} parent=1 // loop_pre_header
      _
    $region3: #{tpu_custom_call.1} parent=1 // loop_header
      %s9 = sphi 0, %s13
      %p10 = scmp.ge.s32.totalorder %s9, 4
      %s19 = sphi 0, %s21
      %s22 = sphi 0, %s19
      %s23 = sphi 0, %s22
      %s39 = sphi 0, %s23
      %s43 = sphi 0, %s43
      %s45 = sphi 0, %s43
      %s46 = sphi 0, %s45
      %s60 = sphi 0, %s46
      %s64 = sphi 0, %s64
      %s66 = sphi 0, %s64
      %s67 = sphi 0, %s66
      %s81 = sphi 0, %s67
      %s87 = sphi 0, %s89
      %s90 = sphi 0, %s87
      %s91 = sphi 0, %s90
      %s107 = sphi 0, %s91
    $region4: #{tpu_custom_call.1} parent=1 // loop_header_branch
      %12 = sbr.rel (%p10) target = $region8
    $region5: #{tpu_custom_call.1} parent=1 // loop_body
      %s14 = ssub.s32 %s9, 1
      %s15 = ssub.s32 %s9, 2
      %s16 = sadd.s32 %s9, 1
      %s17 = ssub.s32 %s9, %s16
      %p18 = scmp.eq.s32.totalorder %s17, 0
      %s20 = sadd.s32 %s19, 1
      %s21 = scalar_select %p18, %s19, %s20
      %p24 = pneg %p18
      %p25 = scmp.eq.s32.totalorder %s9, 1
      %p26 = por %p24, %p25
      %p27 = scmp.ne.s32.totalorder %s19, %s22
      %p28 = scmp.eq.s32.totalorder %s9, 0
      %p29 = por %p27, %p28
      %p30 = scmp.ne.s32.totalorder %s19, %s22
      %p31 = scmp.eq.s32.totalorder %s14, 1
      %p32 = por %p30, %p31
      %p33 = scmp.ne.s32.totalorder %s22, %s23
      %p34 = scmp.eq.s32.totalorder %s14, 0
      %p35 = por %p33, %p34
      %p36 = scmp.ne.s32.totalorder %s22, %s23
      %p37 = scmp.eq.s32.totalorder %s15, 1
      %p38 = por %p36, %p37
      %p40 = scmp.ne.s32.totalorder %s23, %s39
      %p41 = scmp.eq.s32.totalorder %s15, 0
      %p42 = por %p40, %p41
      %s44 = sadd.s32 %s43, 1
      %p47 = scmp.eq.s32.totalorder %s9, 1
      %p48 = scmp.ne.s32.totalorder %s43, %s45
      %p49 = scmp.eq.s32.totalorder %s9, 0
      %p50 = por %p48, %p49
      %p51 = scmp.ne.s32.totalorder %s43, %s45
      %p52 = scmp.eq.s32.totalorder %s14, 1
      %p53 = por %p51, %p52
      %p54 = scmp.ne.s32.totalorder %s45, %s46
      %p55 = scmp.eq.s32.totalorder %s14, 0
      %p56 = por %p54, %p55
      %p57 = scmp.ne.s32.totalorder %s45, %s46
      %p58 = scmp.eq.s32.totalorder %s15, 1
      %p59 = por %p57, %p58
      %p61 = scmp.ne.s32.totalorder %s46, %s60
      %p62 = scmp.eq.s32.totalorder %s15, 0
      %p63 = por %p61, %p62
      %s65 = sadd.s32 %s64, 1
      %p68 = scmp.eq.s32.totalorder %s9, 1
      %p69 = scmp.ne.s32.totalorder %s64, %s66
      %p70 = scmp.eq.s32.totalorder %s9, 0
      %p71 = por %p69, %p70
      %p72 = scmp.ne.s32.totalorder %s64, %s66
      %p73 = scmp.eq.s32.totalorder %s14, 1
      %p74 = por %p72, %p73
      %p75 = scmp.ne.s32.totalorder %s66, %s67
      %p76 = scmp.eq.s32.totalorder %s14, 0
      %p77 = por %p75, %p76
      %p78 = scmp.ne.s32.totalorder %s66, %s67
      %p79 = scmp.eq.s32.totalorder %s15, 1
      %p80 = por %p78, %p79
      %p82 = scmp.ne.s32.totalorder %s67, %s81
      %p83 = scmp.eq.s32.totalorder %s15, 0
      %p84 = por %p82, %p83
      %s85 = ssub.s32 %s9, %s16
      %p86 = scmp.eq.s32.totalorder %s85, 0
      %s88 = sadd.s32 %s87, 1
      %s89 = scalar_select %p86, %s87, %s88
      %p92 = pneg %p86
      %p93 = scmp.eq.s32.totalorder %s9, 1
      %p94 = por %p92, %p93
      %p95 = scmp.ne.s32.totalorder %s87, %s90
      %p96 = scmp.eq.s32.totalorder %s9, 0
      %p97 = por %p95, %p96
      %p98 = scmp.ne.s32.totalorder %s87, %s90
      %p99 = scmp.eq.s32.totalorder %s14, 1
      %p100 = por %p98, %p99
      %p101 = scmp.ne.s32.totalorder %s90, %s91
      %p102 = scmp.eq.s32.totalorder %s14, 0
      %p103 = por %p101, %p102
      %p104 = scmp.ne.s32.totalorder %s90, %s91
      %p105 = scmp.eq.s32.totalorder %s15, 1
      %p106 = por %p104, %p105
      %p108 = scmp.ne.s32.totalorder %s91, %s107
      %p109 = scmp.eq.s32.totalorder %s15, 0
      %p110 = por %p108, %p109
      %p111 = scmp.le.s32.totalorder 1, %s9
      %p112 = scmp.lt.s32.totalorder %s9, 3
      %p113 = pnand %p111, %p112
      %p114 = pneg %p113
      // Predicated region
      $region9: #{tpu_custom_call.1} parent=5 // pred_check
        _
      $region10: #{tpu_custom_call.1} parent=5 // pred_check_branch
        %116 = sbr.rel (%p113) target = $region12
      $region11: #{tpu_custom_call.1} parent=5 // pred_region
        %s117 = ssub.s32 %s9, 1
        // Predicated region
        $region13: #{tpu_custom_call.1} parent=11 // pred_check
          %p118 = pneg %p56
        $region14: #{tpu_custom_call.1} parent=11 // pred_check_branch
          %120 = sbr.rel (%p118) target = $region16
        $region15: #{tpu_custom_call.1} parent=11 // pred_region
          _
        $region16: #{tpu_custom_call.1} parent=11 // pred_fallthru
          _
        // Predicated region
        $region17: #{tpu_custom_call.1} parent=11 // pred_check
          %p121 = pneg %p77
        $region18: #{tpu_custom_call.1} parent=11 // pred_check_branch
          %123 = sbr.rel (%p121) target = $region20
        $region19: #{tpu_custom_call.1} parent=11 // pred_region
          _
        $region20: #{tpu_custom_call.1} parent=11 // pred_fallthru
          _
      $region12: #{tpu_custom_call.1} parent=5 // pred_fallthru
        _
      %p124 = scmp.lt.s32.totalorder %s9, 2
      // Predicated region
      $region21: #{tpu_custom_call.1} parent=5 // pred_check
        %p125 = pneg %p124
      $region22: #{tpu_custom_call.1} parent=5 // pred_check_branch
        %127 = sbr.rel (%p125) target = $region24
      $region23: #{tpu_custom_call.1} parent=5 // pred_region
        // Predicated region
        $region25: #{tpu_custom_call.1} parent=23 // pred_check
          %p128 = pneg %p29
        $region26: #{tpu_custom_call.1} parent=23 // pred_check_branch
          %130 = sbr.rel (%p128) target = $region28
        $region27: #{tpu_custom_call.1} parent=23 // pred_region
          %s131 = smul.u32 13, %s9
          %s132 = ssub.s32 25, %s131
          %p133 = scmp.lt.s32.totalorder %s132, 13
          %s134 = scalar_select %p133, %s132, 13
          %s135 = smul.u32 128, %s134
          %p136 = scmp.lt.s32.totalorder %s131, 24
          %s137 = scalar_select %p136, %s131, 24
          %s138 = smul.addr %s137, 8
          %s139 = scalar_lea.vmem %s0, %s138
          %s140 = smul.u32 13, %s9
          %s141 = ssub.s32 25, %s140
          %p142 = scmp.lt.s32.totalorder %s141, 13
          %s143 = scalar_select %p142, %s141, 13
          %s144 = smul.u32 128, %s143
        $region28: #{tpu_custom_call.1} parent=23 // pred_fallthru
          _
      $region24: #{tpu_custom_call.1} parent=5 // pred_fallthru
        _
      %p145 = scmp.le.s32.totalorder 1, %s9
      %p146 = scmp.lt.s32.totalorder %s9, 3
      %p147 = pnand %p145, %p146
      %p148 = pneg %p147
      // Predicated region
      $region29: #{tpu_custom_call.1} parent=5 // pred_check
        _
      $region30: #{tpu_custom_call.1} parent=5 // pred_check_branch
        %150 = sbr.rel (%p147) target = $region32
      $region31: #{tpu_custom_call.1} parent=5 // pred_region
        %s151 = ssub.s32 %s9, 1
        %s152 = smul.u32 13, %s14
        %s153 = ssub.s32 25, %s152
        %p154 = scmp.lt.s32.totalorder %s153, 13
        %s155 = scalar_select %p154, %s153, 13
        %s156 = smul.u32 128, %s155
        %p157 = scmp.lt.s32.totalorder %s152, 24
        %s158 = scalar_select %p157, %s152, 24
        %s159 = smul.addr %s158, 8
        %s160 = scalar_lea.vmem %s0, %s159
        %p161 = pneg %p35
        %p162 = pneg %p32
        %p163 = pneg %p56
        %p164 = pneg %p53
        %p165 = pneg %p77
        %p166 = pneg %p74
        %p167 = pneg %p103
        %p168 = pneg %p100
        %s169 = sand.u32 %s90, 1
        %s170 = sand.u32 %s90, 1
        %s171 = smul.addr %s170, 104
        %s172 = scalar_lea.vmem [#allocation2], %s171
        %s173 = smul.u32 13, %s14
        %s174 = ssub.s32 25, %s173
        %p175 = scmp.lt.s32.totalorder %s174, 13
        %s176 = scalar_select %p175, %s174, 13
        %s177 = smul.u32 128, %s176
        %p178 = scmp.lt.s32.totalorder %s173, 24
        %s179 = scalar_select %p178, %s173, 24
        %s180 = smul.addr %s179, 8
        %s181 = scalar_lea.vmem %s0, %s180
        %s182 = smul.u32 13, %s14
        %s183 = ssub.s32 25, %s182
        %p184 = scmp.lt.s32.totalorder %s183, 13
        %s185 = scalar_select %p184, %s183, 13
        %s186 = smul.u32 128, %s185
        %s187 = smul.u32 13, %s14
        %s188 = ssub.s32 25, %s187
        %p189 = scmp.lt.s32.totalorder %s188, 13
        %s190 = scalar_select %p189, %s188, 13
        %s191 = smul.u32 128, %s190
        %v192 = vld [vmem:[%s181] sm:$0xff]
        %v193 = vld [vmem:[%s181 + $0x8] sm:$0xff]
        %v194 = vld [vmem:[%s181 + $0x10] sm:$0xff]
        %v195 = vld [vmem:[%s181 + $0x18] sm:$0xff]
        %v196 = vld [vmem:[%s181 + $0x20] sm:$0xff]
        %v197 = vld [vmem:[%s181 + $0x28] sm:$0xff]
        %v198 = vld [vmem:[%s181 + $0x30] sm:$0xff]
        %v199 = vld [vmem:[%s181 + $0x38] sm:$0xff]
        %v200 = vld [vmem:[%s181 + $0x40] sm:$0xff]
        %v201 = vld [vmem:[%s181 + $0x48] sm:$0xff]
        %v202 = vld [vmem:[%s181 + $0x50] sm:$0xff]
        %v203 = vld [vmem:[%s181 + $0x58] sm:$0xff]
        %v204 = vld [vmem:[%s181 + $0x60] sm:$0xff]
        %v205 = vld [vmem:[%s1] sm:$0xff]
        %v206 = vld [vmem:[%s1 + $0x8] sm:$0x3]
        %v207 = vld [vmem:[%s2] sm:$0x1]
        %v209 = vlaneseq
        %v210 = vshrl.u32 %v209, 7
        %v211 = vsub.s32 0, %v210
        %v212 = vrot.slane %v207, %v211
        %vm214 = vcmask 80896
        %v216 = vsel %vm214, %v192, 0
        %v219 = vsel %vm214, %v193, 0
        %v222 = vsel %vm214, %v194, 0
        %v225 = vsel %vm214, %v195, 0
        %v228 = vsel %vm214, %v196, 0
        %v231 = vsel %vm214, %v197, 0
        %v234 = vsel %vm214, %v198, 0
        %v237 = vsel %vm214, %v199, 0
        %v240 = vsel %vm214, %v200, 0
        %v243 = vsel %vm214, %v201, 0
        %v246 = vsel %vm214, %v202, 0
        %v249 = vsel %vm214, %v203, 0
        %v252 = vsel %vm214, %v204, 0
        %vm254 = vcmask 1041408
        %v256 = vsel %vm254, %v206, 0
        %258 = vmatprep.subr.mxu0 0.0
        %259 = vmatpush1.msra.mxu0 %v205
        %260 = vmatprep.subr.mxu0 0.0
        %261 = vmatpush1.msra.mxu0 %v256
        %262 = vmatprep.subr.mxu0 0.0
        %263 = vmatpush1.msra.mxu0 0.0
        %264 = vmatprep.subr.mxu0 0.0
        %265 = vmatpush1.msra.mxu0 0.0
        %266 = vmatprep.subr.mxu0 0.0
        %267 = vmatpush1.msra.mxu0 0.0
        %268 = vmatprep.subr.mxu0 0.0
        %269 = vmatpush1.msra.mxu0 0.0
        %270 = vmatprep.subr.mxu0 0.0
        %271 = vmatpush1.msra.mxu0 0.0
        %272 = vmatprep.subr.mxu0 0.0
        %273 = vmatpush1.msra.mxu0 0.0
        %274 = vmatprep.subr.mxu0 0.0
        %275 = vmatpush1.msra.mxu0 0.0
        %276 = vmatprep.subr.mxu0 0.0
        %277 = vmatpush1.msra.mxu0 0.0
        %278 = vmatprep.subr.mxu0 0.0
        %279 = vmatpush1.msra.mxu0 0.0
        %280 = vmatprep.subr.mxu0 0.0
        %281 = vmatpush1.msra.mxu0 0.0
        %282 = vmatprep.subr.mxu0 0.0
        %283 = vmatpush1.msra.mxu0 0.0
        %284 = vmatprep.subr.mxu0 0.0
        %285 = vmatpush1.msra.mxu0 0.0
        %286 = vmatprep.subr.mxu0 0.0
        %287 = vmatpush1.msra.mxu0 0.0
        %288 = vmatprep.subr.mxu0 0.0
        %289 = vmatpush1.msra.mxu0 0.0
        %290 = vmatprep.subr.mxu0 0.0
        %291 = vmatpush1.msra.mxu0 0.0
        %292 = vmatprep.subr.mxu0 0.0
        %293 = vmatpush1.msra.mxu0 0.0
        %294 = vmatprep.subr.mxu0 0.0
        %295 = vmatpush1.msra.mxu0 0.0
        %296 = vmatprep.subr.mxu0 0.0
        %297 = vmatpush1.msra.mxu0 0.0
        %298 = vmatprep.subr.mxu0 0.0
        %299 = vmatpush1.msra.mxu0 0.0
        %300 = vmatprep.subr.mxu0 0.0
        %301 = vmatpush1.msra.mxu0 0.0
        %302 = vmatprep.subr.mxu0 0.0
        %303 = vmatpush1.msra.mxu0 0.0
        %304 = vmatprep.subr.mxu0 0.0
        %305 = vmatpush1.msra.mxu0 0.0
        %306 = vmatprep.subr.mxu0 0.0
        %307 = vmatpush1.msra.mxu0 0.0
        %308 = vmatprep.subr.mxu0 0.0
        %309 = vmatpush1.msra.mxu0 0.0
        %310 = vmatprep.subr.mxu0 0.0
        %311 = vmatpush1.msra.mxu0 0.0
        %312 = vmatprep.subr.mxu0 0.0
        %313 = vmatpush1.msra.mxu0 0.0
        %314 = vmatprep.subr.mxu0 0.0
        %315 = vmatpush1.msra.mxu0 0.0
        %316 = vmatprep.subr.mxu0 0.0
        %317 = vmatpush1.msra.mxu0 0.0
        %318 = vmatprep.subr.mxu0 0.0
        %319 = vmatpush1.msra.mxu0 0.0
        %320 = vmatprep.subr.mxu0 0.0
        %321 = vmatpush1.msra.mxu0 0.0
        %322 = vmatprep.mubr.f32.mxu0 0.0
        %323 = vmatmul.mubr.f32.gmra.mrb[0].mxu0 %v216
        %v324 = vpop.f32.mrb[0].mxu0
        %v325 = vadd.f32 %v212, %v324
        %v326 = vpop.f32.mrb[0].mxu0
        %327 = vmatprep.mubr.f32.mxu0 0.0
        %328 = vmatmul.mubr.f32.gmra.mrb[0].mxu0 %v219
        %v329 = vpop.f32.mrb[0].mxu0
        %v330 = vadd.f32 %v212, %v329
        %v331 = vpop.f32.mrb[0].mxu0
        %332 = vmatprep.mubr.f32.mxu0 0.0
        %333 = vmatmul.mubr.f32.gmra.mrb[0].mxu0 %v222
        %v334 = vpop.f32.mrb[0].mxu0
        %v335 = vadd.f32 %v212, %v334
        %v336 = vpop.f32.mrb[0].mxu0
        %337 = vmatprep.mubr.f32.mxu0 0.0
        %338 = vmatmul.mubr.f32.gmra.mrb[0].mxu0 %v225
        %v339 = vpop.f32.mrb[0].mxu0
        %v340 = vadd.f32 %v212, %v339
        %v341 = vpop.f32.mrb[0].mxu0
        %342 = vmatprep.mubr.f32.mxu0 0.0
        %343 = vmatmul.mubr.f32.gmra.mrb[0].mxu0 %v228
        %v344 = vpop.f32.mrb[0].mxu0
        %v345 = vadd.f32 %v212, %v344
        %v346 = vpop.f32.mrb[0].mxu0
        %347 = vmatprep.mubr.f32.mxu0 0.0
        %348 = vmatmul.mubr.f32.gmra.mrb[0].mxu0 %v231
        %v349 = vpop.f32.mrb[0].mxu0
        %v350 = vadd.f32 %v212, %v349
        %v351 = vpop.f32.mrb[0].mxu0
        %352 = vmatprep.mubr.f32.mxu0 0.0
        %353 = vmatmul.mubr.f32.gmra.mrb[0].mxu0 %v234
        %v354 = vpop.f32.mrb[0].mxu0
        %v355 = vadd.f32 %v212, %v354
        %v356 = vpop.f32.mrb[0].mxu0
        %357 = vmatprep.mubr.f32.mxu0 0.0
        %358 = vmatmul.mubr.f32.gmra.mrb[0].mxu0 %v237
        %v359 = vpop.f32.mrb[0].mxu0
        %v360 = vadd.f32 %v212, %v359
        %v361 = vpop.f32.mrb[0].mxu0
        %362 = vmatprep.mubr.f32.mxu0 0.0
        %363 = vmatmul.mubr.f32.gmra.mrb[0].mxu0 %v240
        %v364 = vpop.f32.mrb[0].mxu0
        %v365 = vadd.f32 %v212, %v364
        %v366 = vpop.f32.mrb[0].mxu0
        %367 = vmatprep.mubr.f32.mxu0 0.0
        %368 = vmatmul.mubr.f32.gmra.mrb[0].mxu0 %v243
        %v369 = vpop.f32.mrb[0].mxu0
        %v370 = vadd.f32 %v212, %v369
        %v371 = vpop.f32.mrb[0].mxu0
        %372 = vmatprep.mubr.f32.mxu0 0.0
        %373 = vmatmul.mubr.f32.gmra.mrb[0].mxu0 %v246
        %v374 = vpop.f32.mrb[0].mxu0
        %v375 = vadd.f32 %v212, %v374
        %v376 = vpop.f32.mrb[0].mxu0
        %377 = vmatprep.mubr.f32.mxu0 0.0
        %378 = vmatmul.mubr.f32.gmra.mrb[0].mxu0 %v249
        %v379 = vpop.f32.mrb[0].mxu0
        %v380 = vadd.f32 %v212, %v379
        %v381 = vpop.f32.mrb[0].mxu0
        %382 = vmatprep.mubr.f32.mxu0 0.0
        %383 = vmatmul.mubr.f32.gmra.mrb[0].mxu0 %v252
        %v384 = vpop.f32.mrb[0].mxu0
        %v385 = vadd.f32 %v212, %v384
        %v386 = vpop.f32.mrb[0].mxu0
        %387 = vdwg.mxu0
        %388 = vst.msk [vmem:[%s172] sm:$0xff] %vm214, %v325
        %389 = vst.msk [vmem:[%s172 + $0x8] sm:$0xff] %vm214, %v330
        %390 = vst.msk [vmem:[%s172 + $0x10] sm:$0xff] %vm214, %v335
        %391 = vst.msk [vmem:[%s172 + $0x18] sm:$0xff] %vm214, %v340
        %392 = vst.msk [vmem:[%s172 + $0x20] sm:$0xff] %vm214, %v345
        %393 = vst.msk [vmem:[%s172 + $0x28] sm:$0xff] %vm214, %v350
        %394 = vst.msk [vmem:[%s172 + $0x30] sm:$0xff] %vm214, %v355
        %395 = vst.msk [vmem:[%s172 + $0x38] sm:$0xff] %vm214, %v360
        %396 = vst.msk [vmem:[%s172 + $0x40] sm:$0xff] %vm214, %v365
        %397 = vst.msk [vmem:[%s172 + $0x48] sm:$0xff] %vm214, %v370
        %398 = vst.msk [vmem:[%s172 + $0x50] sm:$0xff] %vm214, %v375
        %399 = vst.msk [vmem:[%s172 + $0x58] sm:$0xff] %vm214, %v380
        %400 = vst.msk [vmem:[%s172 + $0x60] sm:$0xff] %vm214, %v385
        %s401 = sand.u32 %s90, 1
        %s402 = sand.u32 %s90, 1
        %s403 = smul.addr %s402, 104
        %s404 = scalar_lea.vmem [#allocation2], %s403
        // Predicated region
        $region33: #{tpu_custom_call.1} parent=31 // pred_check
          %p405 = pneg %p100
        $region34: #{tpu_custom_call.1} parent=31 // pred_check_branch
          %407 = sbr.rel (%p405) target = $region36
        $region35: #{tpu_custom_call.1} parent=31 // pred_region
          %s408 = smul.u32 13, %s14
          %s409 = ssub.s32 25, %s408
          %p410 = scmp.lt.s32.totalorder %s409, 13
          %s411 = scalar_select %p410, %s409, 13
          %s412 = smul.u32 128, %s411
          %p413 = scmp.ne.s32.totalorder 0, %s412
          %s414 = smul.addr %s408, 8
          %s415 = scalar_lea.vmem %s3, %s414
          // Predicated region
          $region37: #{tpu_custom_call.1} parent=35 // pred_check
            %p416 = pneg %p413
          $region38: #{tpu_custom_call.1} parent=35 // pred_check_branch
            %418 = sbr.rel (%p416) target = $region40
          $region39: #{tpu_custom_call.1} parent=35 // pred_region
            // Predicated region
            $region41: #{tpu_custom_call.1} parent=39 // pred_check
              _
            $region42: #{tpu_custom_call.1} parent=39 // pred_check_branch
              %420 = sbr.rel (0) target = $region44
            $region43: #{tpu_custom_call.1} parent=39 // pred_region
              // Predicated region
              $region63: #{tpu_custom_call.1} parent=43 // pred_check
                _
              $region64: #{tpu_custom_call.1} parent=43 // pred_check_branch
                %494 = sbr.rel (0) target = $region66
              $region65: #{tpu_custom_call.1} parent=43 // pred_region
                %s495 = sdiv.u32.pop %s411, 13
                %s496 = srem.u32.pop %s411, 13
                // While loop
                $region67: #{tpu_custom_call.1} parent=65 // loop_pre_header
                  _
                $region68: #{tpu_custom_call.1} parent=65 // loop_header
                  %s498 = sphi 0, %s500
                  %p499 = scmp.ge.s32.totalorder %s498, %s495
                  %s503 = sphi 0, %s534
                  %s504 = sphi %s404, %s537
                  %s505 = sphi %s415, %s538
                $region69: #{tpu_custom_call.1} parent=65 // loop_header_branch
                  %502 = sbr.rel (%p499) target = $region73
                $region70: #{tpu_custom_call.1} parent=65 // loop_body
                  %v506 = vld [vmem:[%s504] sm:$0xff]
                  %507 = vst [vmem:[%s505] sm:$0xff] %v506
                  %v508 = vld [vmem:[%s504 + $0x8] sm:$0xff]
                  %509 = vst [vmem:[%s505 + $0x8] sm:$0xff] %v508
                  %v510 = vld [vmem:[%s504 + $0x10] sm:$0xff]
                  %511 = vst [vmem:[%s505 + $0x10] sm:$0xff] %v510
                  %v512 = vld [vmem:[%s504 + $0x18] sm:$0xff]
                  %513 = vst [vmem:[%s505 + $0x18] sm:$0xff] %v512
                  %v514 = vld [vmem:[%s504 + $0x20] sm:$0xff]
                  %515 = vst [vmem:[%s505 + $0x20] sm:$0xff] %v514
                  %v516 = vld [vmem:[%s504 + $0x28] sm:$0xff]
                  %517 = vst [vmem:[%s505 + $0x28] sm:$0xff] %v516
                  %v518 = vld [vmem:[%s504 + $0x30] sm:$0xff]
                  %519 = vst [vmem:[%s505 + $0x30] sm:$0xff] %v518
                  %v520 = vld [vmem:[%s504 + $0x38] sm:$0xff]
                  %521 = vst [vmem:[%s505 + $0x38] sm:$0xff] %v520
                  %v522 = vld [vmem:[%s504 + $0x40] sm:$0xff]
                  %523 = vst [vmem:[%s505 + $0x40] sm:$0xff] %v522
                  %v524 = vld [vmem:[%s504 + $0x48] sm:$0xff]
                  %525 = vst [vmem:[%s505 + $0x48] sm:$0xff] %v524
                  %v526 = vld [vmem:[%s504 + $0x50] sm:$0xff]
                  %527 = vst [vmem:[%s505 + $0x50] sm:$0xff] %v526
                  %v528 = vld [vmem:[%s504 + $0x58] sm:$0xff]
                  %529 = vst [vmem:[%s505 + $0x58] sm:$0xff] %v528
                  %v530 = vld [vmem:[%s504 + $0x60] sm:$0xff]
                  %531 = vst [vmem:[%s505 + $0x60] sm:$0xff] %v530
                  %s532 = sadd.s32 1, %s503
                  %p533 = scmp.ge.s32.totalorder %s532, %s495
                  %s534 = scalar_select %p533, 0, %s532
                  %s535 = smul.u32 %s534, 104
                  %s536 = smul.u32 %s534, 104
                  %s537 = scalar_lea.vmem %s404, %s535 [#allocation2]
                  %s538 = scalar_lea.vmem %s415, %s536
                $region71: #{tpu_custom_call.1} parent=65 // loop_footer
                  %s500 = sadd.s32 %s498, 1
                $region72: #{tpu_custom_call.1} parent=65 // loop_footer_branch
                  %497 = sbr.rel target = $region68
                $region73: #{tpu_custom_call.1} parent=65 // loop_exit
                  _
                %s539 = sdiv.u32.pop %s411, 13
                %s540 = srem.u32.pop %s411, 13
                %s541 = smul.u32 %s539, 13
                %s542 = smul.u32 8, %s541
                %s543 = scalar_lea.vmem %s404, %s542 [#allocation2]
                %s544 = smul.u32 8, %s541
                %s545 = scalar_lea.vmem %s415, %s544
                // While loop
                $region74: #{tpu_custom_call.1} parent=65 // loop_pre_header
                  _
                $region75: #{tpu_custom_call.1} parent=65 // loop_header
                  %s547 = sphi 0, %s549
                  %p548 = scmp.ge.s32.totalorder %s547, %s540
                  %s552 = sphi 0, %s559
                  %s553 = sphi %s543, %s562
                  %s554 = sphi %s545, %s563
                $region76: #{tpu_custom_call.1} parent=65 // loop_header_branch
                  %551 = sbr.rel (%p548) target = $region80
                $region77: #{tpu_custom_call.1} parent=65 // loop_body
                  %v555 = vld [vmem:[%s553] sm:$0xff]
                  %556 = vst [vmem:[%s554] sm:$0xff] %v555
                  %s557 = sadd.s32 1, %s552
                  %p558 = scmp.ge.s32.totalorder %s557, %s540
                  %s559 = scalar_select %p558, 0, %s557
                  %s560 = smul.u32 %s559, 8
                  %s561 = smul.u32 %s559, 8
                  %s562 = scalar_lea.vmem %s543, %s560 [#allocation2]
                  %s563 = scalar_lea.vmem %s545, %s561
                $region78: #{tpu_custom_call.1} parent=65 // loop_footer
                  %s549 = sadd.s32 %s547, 1
                $region79: #{tpu_custom_call.1} parent=65 // loop_footer_branch
                  %546 = sbr.rel target = $region75
                $region80: #{tpu_custom_call.1} parent=65 // loop_exit
                  _
              $region66: #{tpu_custom_call.1} parent=43 // pred_fallthru
                _
              // Predicated region
              $region81: #{tpu_custom_call.1} parent=43 // pred_check
                _
              $region82: #{tpu_custom_call.1} parent=43 // pred_check_branch
                %565 = sbr.rel target = $region84
              $region83: #{tpu_custom_call.1} parent=43 // pred_region
                _
              $region84: #{tpu_custom_call.1} parent=43 // pred_fallthru
                _
            $region44: #{tpu_custom_call.1} parent=39 // pred_fallthru
              _
            // Predicated region
            $region45: #{tpu_custom_call.1} parent=39 // pred_check
              _
            $region46: #{tpu_custom_call.1} parent=39 // pred_check_branch
              %422 = sbr.rel target = $region48
            $region47: #{tpu_custom_call.1} parent=39 // pred_region
              %s424 = sdiv.u32.pop %s411, 13
              %s425 = srem.u32.pop %s411, 13
              // While loop
              $region49: #{tpu_custom_call.1} parent=47 // loop_pre_header
                _
              $region50: #{tpu_custom_call.1} parent=47 // loop_header
                %s427 = sphi 0, %s429
                %p428 = scmp.ge.s32.totalorder %s427, %s424
                %s432 = sphi 0, %s463
                %s433 = sphi %s404, %s466
                %s434 = sphi %s415, %s467
              $region51: #{tpu_custom_call.1} parent=47 // loop_header_branch
                %431 = sbr.rel (%p428) target = $region55
              $region52: #{tpu_custom_call.1} parent=47 // loop_body
                %v435 = vld [vmem:[%s433] sm:$0xff]
                %436 = vst [vmem:[%s434] sm:$0xff] %v435
                %v437 = vld [vmem:[%s433 + $0x8] sm:$0xff]
                %438 = vst [vmem:[%s434 + $0x8] sm:$0xff] %v437
                %v439 = vld [vmem:[%s433 + $0x10] sm:$0xff]
                %440 = vst [vmem:[%s434 + $0x10] sm:$0xff] %v439
                %v441 = vld [vmem:[%s433 + $0x18] sm:$0xff]
                %442 = vst [vmem:[%s434 + $0x18] sm:$0xff] %v441
                %v443 = vld [vmem:[%s433 + $0x20] sm:$0xff]
                %444 = vst [vmem:[%s434 + $0x20] sm:$0xff] %v443
                %v445 = vld [vmem:[%s433 + $0x28] sm:$0xff]
                %446 = vst [vmem:[%s434 + $0x28] sm:$0xff] %v445
                %v447 = vld [vmem:[%s433 + $0x30] sm:$0xff]
                %448 = vst [vmem:[%s434 + $0x30] sm:$0xff] %v447
                %v449 = vld [vmem:[%s433 + $0x38] sm:$0xff]
                %450 = vst [vmem:[%s434 + $0x38] sm:$0xff] %v449
                %v451 = vld [vmem:[%s433 + $0x40] sm:$0xff]
                %452 = vst [vmem:[%s434 + $0x40] sm:$0xff] %v451
                %v453 = vld [vmem:[%s433 + $0x48] sm:$0xff]
                %454 = vst [vmem:[%s434 + $0x48] sm:$0xff] %v453
                %v455 = vld [vmem:[%s433 + $0x50] sm:$0xff]
                %456 = vst [vmem:[%s434 + $0x50] sm:$0xff] %v455
                %v457 = vld [vmem:[%s433 + $0x58] sm:$0xff]
                %458 = vst [vmem:[%s434 + $0x58] sm:$0xff] %v457
                %v459 = vld [vmem:[%s433 + $0x60] sm:$0xff]
                %460 = vst [vmem:[%s434 + $0x60] sm:$0xff] %v459
                %s461 = sadd.s32 1, %s432
                %p462 = scmp.ge.s32.totalorder %s461, %s424
                %s463 = scalar_select %p462, 0, %s461
                %s464 = smul.u32 %s463, 104
                %s465 = smul.u32 %s463, 104
                %s466 = scalar_lea.vmem %s404, %s464 [#allocation2]
                %s467 = scalar_lea.vmem %s415, %s465
              $region53: #{tpu_custom_call.1} parent=47 // loop_footer
                %s429 = sadd.s32 %s427, 1
              $region54: #{tpu_custom_call.1} parent=47 // loop_footer_branch
                %426 = sbr.rel target = $region50
              $region55: #{tpu_custom_call.1} parent=47 // loop_exit
                _
              %s468 = sdiv.u32.pop %s411, 13
              %s469 = srem.u32.pop %s411, 13
              %s470 = smul.u32 %s468, 13
              %s471 = smul.u32 8, %s470
              %s472 = scalar_lea.vmem %s404, %s471 [#allocation2]
              %s473 = smul.u32 8, %s470
              %s474 = scalar_lea.vmem %s415, %s473
              // While loop
              $region56: #{tpu_custom_call.1} parent=47 // loop_pre_header
                _
              $region57: #{tpu_custom_call.1} parent=47 // loop_header
                %s476 = sphi 0, %s478
                %p477 = scmp.ge.s32.totalorder %s476, %s469
                %s481 = sphi 0, %s488
                %s482 = sphi %s472, %s491
                %s483 = sphi %s474, %s492
              $region58: #{tpu_custom_call.1} parent=47 // loop_header_branch
                %480 = sbr.rel (%p477) target = $region62
              $region59: #{tpu_custom_call.1} parent=47 // loop_body
                %v484 = vld [vmem:[%s482] sm:$0xff]
                %485 = vst [vmem:[%s483] sm:$0xff] %v484
                %s486 = sadd.s32 1, %s481
                %p487 = scmp.ge.s32.totalorder %s486, %s469
                %s488 = scalar_select %p487, 0, %s486
                %s489 = smul.u32 %s488, 8
                %s490 = smul.u32 %s488, 8
                %s491 = scalar_lea.vmem %s472, %s489 [#allocation2]
                %s492 = scalar_lea.vmem %s474, %s490
              $region60: #{tpu_custom_call.1} parent=47 // loop_footer
                %s478 = sadd.s32 %s476, 1
              $region61: #{tpu_custom_call.1} parent=47 // loop_footer_branch
                %475 = sbr.rel target = $region57
              $region62: #{tpu_custom_call.1} parent=47 // loop_exit
                _
            $region48: #{tpu_custom_call.1} parent=39 // pred_fallthru
              _
          $region40: #{tpu_custom_call.1} parent=35 // pred_fallthru
            _
          %566 = vnop
        $region36: #{tpu_custom_call.1} parent=31 // pred_fallthru
          _
      $region32: #{tpu_custom_call.1} parent=5 // pred_fallthru
        _
      %p567 = scmp.le.s32.totalorder 2, %s9
      // Predicated region
      $region85: #{tpu_custom_call.1} parent=5 // pred_check
        %p568 = pneg %p567
      $region86: #{tpu_custom_call.1} parent=5 // pred_check_branch
        %570 = sbr.rel (%p568) target = $region88
      $region87: #{tpu_custom_call.1} parent=5 // pred_region
        %s571 = ssub.s32 %s9, 2
        // Predicated region
        $region89: #{tpu_custom_call.1} parent=87 // pred_check
          %p572 = pneg %p106
        $region90: #{tpu_custom_call.1} parent=87 // pred_check_branch
          %574 = sbr.rel (%p572) target = $region92
        $region91: #{tpu_custom_call.1} parent=87 // pred_region
          %s575 = sand.u32 %s91, 1
          %s576 = sand.u32 %s91, 1
          %s577 = smul.addr %s576, 104
          %s578 = scalar_lea.vmem [#allocation2], %s577
        $region92: #{tpu_custom_call.1} parent=87 // pred_fallthru
          _
      $region88: #{tpu_custom_call.1} parent=5 // pred_fallthru
        _
    $region6: #{tpu_custom_call.1} parent=1 // loop_footer
      %s13 = sadd.s32 1, %s9
    $region7: #{tpu_custom_call.1} parent=1 // loop_footer_branch
      %8 = sbr.rel target = $region3
    $region8: #{tpu_custom_call.1} parent=1 // loop_exit
      _

</llo_original>
